<compile_context>
chip_gen: v7x
topology: tpu7x:2x2x1
jax: 0.10.0
libtpu: 0.0.40
codegen_flags: <defaults>
</compile_context>

<pallas_src>
import functools
import math

import jax
import jax.numpy as jnp
from jax.experimental import pallas as pl
from jax.experimental.pallas import tpu as pltpu

NUM_GROUPS = 32
EPS = 1e-5


# -----------------------------------------------------------------------------
# Kernel 1: GroupNorm + fused QKV 1x1 projection (one grid step per batch elem)
# -----------------------------------------------------------------------------
def groupnorm_qkv_kernel(x_ref, gmap_ref, gmapT_ref, gamma_ref, beta_ref,
                         wqkv_ref, bqkv_ref, q_ref, k_ref, v_ref):
    x = x_ref[...]                                    # (HW, C) f32
    hw, c = x.shape
    g = gmap_ref.shape[1]
    n = float(hw * (c // g))                          # elements per group

    # GroupNorm stats via one-hot channel->group matmuls; [sum; sumsq] stacked
    # into a single (2, C) tile so only two small MXU matmuls are issued.
    ch_sum = jnp.sum(x, axis=0, keepdims=True)        # (1, C)
    ch_sq = jnp.sum(x * x, axis=0, keepdims=True)     # (1, C)
    stats = jnp.concatenate([ch_sum, ch_sq], axis=0)  # (2, C)
    grp = jnp.dot(stats, gmap_ref[...],
                  preferred_element_type=jnp.float32) * (1.0 / n)          # (2, G)
    per_ch = jnp.dot(grp, gmapT_ref[...],
                     preferred_element_type=jnp.float32)                   # (2, C)
    mean_c = per_ch[0:1, :]
    var_c = jnp.maximum(per_ch[1:2, :] - mean_c * mean_c, 0.0)             # clamp
    inv_std = jax.lax.rsqrt(var_c + EPS)
    h = (x - mean_c) * (inv_std * gamma_ref[...]) + beta_ref[...]          # (HW, C)

    # Fused 1x1 q/k/v projection: single (HW, C) @ (C, 3C) bf16 matmul (f32 acc).
    qkv = jnp.dot(h.astype(jnp.bfloat16), wqkv_ref[...],
                  preferred_element_type=jnp.float32) + bqkv_ref[...]      # (HW, 3C)
    q_ref[...] = qkv[:, 0 * c:1 * c].astype(jnp.bfloat16)
    k_ref[...] = qkv[:, 1 * c:2 * c].astype(jnp.bfloat16)
    v_ref[...] = qkv[:, 2 * c:3 * c].astype(jnp.bfloat16)


# -----------------------------------------------------------------------------
# Kernel 2: flash attention over KV tiles + output projection + residual
# -----------------------------------------------------------------------------
def flash_attn_proj_kernel(q_ref, k_ref, v_ref, xres_ref, wp_ref, bp_ref, o_ref,
                           *, tkv):
    tq, c = q_ref.shape
    hw = k_ref.shape[0]
    nkv = hw // tkv
    scale = 1.0 / math.sqrt(float(c))

    q = q_ref[...]                                    # (TQ, C) bf16

    def body(i, carry):
        m, l, acc = carry
        start = pl.multiple_of(i * tkv, tkv)
        kb = k_ref[pl.ds(start, tkv), :]              # (TKV, C) bf16
        vb = v_ref[pl.ds(start, tkv), :]              # (TKV, C) bf16
        # q @ kb^T without an explicit transpose: contract the last dims.
        s = jax.lax.dot_general(
            q, kb, (((1,), (1,)), ((), ())),
            preferred_element_type=jnp.float32) * scale                    # (TQ, TKV)
        m_new = jnp.maximum(m, jnp.max(s, axis=-1, keepdims=True))
        alpha = jnp.exp(m - m_new)
        p = jnp.exp(s - m_new)
        l_new = alpha * l + jnp.sum(p, axis=-1, keepdims=True)
        acc_new = alpha * acc + jnp.dot(p.astype(jnp.bfloat16), vb,
                                        preferred_element_type=jnp.float32)
        return m_new, l_new, acc_new

    m0 = jnp.full((tq, 1), -jnp.inf, jnp.float32)
    l0 = jnp.zeros((tq, 1), jnp.float32)
    a0 = jnp.zeros((tq, c), jnp.float32)
    m, l, acc = jax.lax.fori_loop(0, nkv, body, (m0, l0, a0), unroll=nkv <= 8)

    # Normalize once at the end; reciprocal runs on the EUP slot.
    att = acc * pl.reciprocal(l, approx=True)                              # (TQ, C)

    out = jnp.dot(att.astype(jnp.bfloat16), wp_ref[...],
                  preferred_element_type=jnp.float32) + bp_ref[...]        # (TQ, C)
    o_ref[...] = xres_ref[...] + out


# -----------------------------------------------------------------------------
# Wrapper
# -----------------------------------------------------------------------------
def _pick_tile(n, candidates):
    for t in candidates:
        if t <= n and n % t == 0:
            return t
    return n


def _prepare_kernel_params(params, C):
    G = NUM_GROUPS
    cpg = C // G
    gmap = jax.nn.one_hot(jnp.arange(C) // cpg, G, dtype=jnp.float32)      # (C, G)
    gmapT = jnp.transpose(gmap)                                            # (G, C)
    # PyTorch 1x1-conv weights are (C_out, C_in); pre-transpose to (C_in, C_out),
    # fuse q/k/v into one (C, 3C) matrix, and cast MXU weights to bf16 once here
    # so the kernels never transpose or re-cast per grid step.
    wqkv = jnp.concatenate(
        [params["wq"].T, params["wk"].T, params["wv"].T], axis=1
    ).astype(jnp.bfloat16)                                                 # (C, 3C)
    bqkv = jnp.concatenate(
        [params["bq"], params["bk"], params["bv"]]).reshape(1, 3 * C)
    wp_t = params["wp"].T.astype(jnp.bfloat16)                             # (C, C)
    bp = params["bp"].reshape(1, C).astype(jnp.float32)
    gamma = params["gamma"].reshape(1, C).astype(jnp.float32)
    beta = params["beta"].reshape(1, C).astype(jnp.float32)
    return gmap, gmapT, gamma, beta, wqkv, bqkv, wp_t, bp


def attn_block(x_nchw, params):
    B, C, H, W = x_nchw.shape
    assert C % NUM_GROUPS == 0
    HW = H * W
    G = NUM_GROUPS

    TQ = _pick_tile(HW, (256, 128, 64, 32, 16))
    TKV = _pick_tile(HW, (512, 256, 128, 64, 32, 16))
    NQ = HW // TQ

    gmap, gmapT, gamma, beta, wqkv, bqkv, wp_t, bp = _prepare_kernel_params(params, C)

    # NCHW -> (B, HW, C) channels-last for lane-dense matmuls.
    # TODO(synk): fold this layout shuffle into the kernel DMA for very large images.
    x = jnp.transpose(x_nchw, (0, 2, 3, 1)).reshape(B, HW, C).astype(jnp.float32)

    vmem_limit = 64 * 1024 * 1024

    # ---- kernel 1: GroupNorm + fused QKV projection ----
    qkv_shape = jax.ShapeDtypeStruct((B, HW, C), jnp.bfloat16)
    q, k, v = pl.pallas_call(
        groupnorm_qkv_kernel,
        out_shape=(qkv_shape, qkv_shape, qkv_shape),
        grid_spec=pltpu.PrefetchScalarGridSpec(
            num_scalar_prefetch=0,
            grid=(B,),
            in_specs=[
                pl.BlockSpec((None, HW, C), lambda b: (b, 0, 0)),   # x
                pl.BlockSpec((C, G), lambda b: (0, 0)),             # gmap
                pl.BlockSpec((G, C), lambda b: (0, 0)),             # gmap^T
                pl.BlockSpec((1, C), lambda b: (0, 0)),             # gamma
                pl.BlockSpec((1, C), lambda b: (0, 0)),             # beta
                pl.BlockSpec((C, 3 * C), lambda b: (0, 0)),         # Wqkv (bf16)
                pl.BlockSpec((1, 3 * C), lambda b: (0, 0)),         # bqkv
            ],
            out_specs=[
                pl.BlockSpec((None, HW, C), lambda b: (b, 0, 0)),
                pl.BlockSpec((None, HW, C), lambda b: (b, 0, 0)),
                pl.BlockSpec((None, HW, C), lambda b: (b, 0, 0)),
            ],
        ),
        compiler_params=pltpu.CompilerParams(
            dimension_semantics=("parallel",),
            vmem_limit_bytes=vmem_limit),
    )(x, gmap, gmapT, gamma, beta, wqkv, bqkv)

    # ---- kernel 2: flash attention + output projection + residual ----
    out = pl.pallas_call(
        functools.partial(flash_attn_proj_kernel, tkv=TKV),
        out_shape=jax.ShapeDtypeStruct((B, HW, C), jnp.float32),
        grid_spec=pltpu.PrefetchScalarGridSpec(
            num_scalar_prefetch=0,
            grid=(B, NQ),
            in_specs=[
                pl.BlockSpec((None, TQ, C), lambda b, i: (b, i, 0)),  # q tile
                pl.BlockSpec((None, HW, C), lambda b, i: (b, 0, 0)),  # K (resident / b)
                pl.BlockSpec((None, HW, C), lambda b, i: (b, 0, 0)),  # V (resident / b)
                pl.BlockSpec((None, TQ, C), lambda b, i: (b, i, 0)),  # residual x tile
                pl.BlockSpec((C, C), lambda b, i: (0, 0)),            # Wproj^T (bf16)
                pl.BlockSpec((1, C), lambda b, i: (0, 0)),            # bproj
            ],
            out_specs=pl.BlockSpec((None, TQ, C), lambda b, i: (b, i, 0)),
        ),
        compiler_params=pltpu.CompilerParams(
            dimension_semantics=("parallel", "parallel"),
            vmem_limit_bytes=vmem_limit),
    )(q, k, v, x, wp_t, bp)

    return out.reshape(B, H, W, C).transpose(0, 3, 1, 2)


# -----------------------------------------------------------------------------
# Params (PyTorch-style layout) + pure-JAX reference
# -----------------------------------------------------------------------------
def init_params(key, C):
    def xavier(k, gain):
        bound = gain * math.sqrt(6.0 / (C + C))
        return jax.random.uniform(k, (C, C), jnp.float32, -bound, bound)

    kq, kk, kv, kp = jax.random.split(key, 4)
    return dict(
        gamma=jnp.ones((C,), jnp.float32),
        beta=jnp.zeros((C,), jnp.float32),
        wq=xavier(kq, 1.0), bq=jnp.zeros((C,), jnp.float32),
        wk=xavier(kk, 1.0), bk=jnp.zeros((C,), jnp.float32),
        wv=xavier(kv, 1.0), bv=jnp.zeros((C,), jnp.float32),
        wp=xavier(kp, 1e-5), bp=jnp.zeros((C,), jnp.float32),   # proj gain = 1e-5
    )


def reference(x, params):
    B, C, H, W = x.shape
    G = NUM_GROUPS
    xg = x.reshape(B, G, C // G, H, W)
    mean = xg.mean(axis=(2, 3, 4), keepdims=True)
    var = xg.var(axis=(2, 3, 4), keepdims=True)
    hn = (xg - mean) / jnp.sqrt(var + EPS)
    hn = hn.reshape(B, C, H, W) * params["gamma"].reshape(1, C, 1, 1) \
        + params["beta"].reshape(1, C, 1, 1)

    def conv1x1(h, w_, b_):
        return jnp.einsum('oc,bchw->bohw', w_, h) + b_.reshape(1, C, 1, 1)

    q = conv1x1(hn, params["wq"], params["bq"])
    k = conv1x1(hn, params["wk"], params["bk"])
    v = conv1x1(hn, params["wv"], params["bv"])
    q = q.transpose(0, 2, 3, 1).reshape(B, H * W, C)
    k = k.reshape(B, C, H * W)
    w = jnp.einsum('bqc,bck->bqk', q, k) * (C ** -0.5)
    w = jax.nn.softmax(w, axis=-1)
    v = v.transpose(0, 2, 3, 1).reshape(B, H * W, C)
    h = jnp.einsum('bqk,bkc->bqc', w, v)
    h = h.reshape(B, H, W, C).transpose(0, 3, 1, 2)
    h = conv1x1(h, params["wp"], params["bp"])
    return x + h


if __name__ == "__main__":
    key = jax.random.PRNGKey(0)
    kx, kp = jax.random.split(key)
    B, C, H, W = 2, 32, 8, 8   # C must be divisible by 32 (GroupNorm(32, C))
    x = jax.random.normal(kx, (B, C, H, W), jnp.float32)
    params = init_params(kp, C)

    out = jax.block_until_ready(attn_block(x, params))
    ref = reference(x, params)
    assert out.shape == (B, C, H, W)
    err = float(jnp.max(jnp.abs(out - ref)))
    assert jnp.allclose(out, ref, rtol=1e-4, atol=1e-4), err

    # Stress check: swap in a gain-1 output projection so the attention path is not
    # suppressed by the module's 1e-5 proj init; tolerance accounts for bf16 MXU
    # operands inside the kernels (f32 accumulation throughout).
    params_stress = dict(params)
    params_stress["wp"] = params["wq"]
    out2 = jax.block_until_ready(attn_block(x, params_stress))
    ref2 = reference(x, params_stress)
    err2 = float(jnp.max(jnp.abs(out2 - ref2)))
    assert jnp.allclose(out2, ref2, rtol=5e-2, atol=5e-2), err2

    print("KERNEL_OK")
</pallas_src>

<mosaic_0001>
module attributes {stable_mosaic.version = 11 : i64} {
  func.func @groupnorm_qkv_kernel(%arg0: i32, %arg1: memref<1x64x32xf32, #tpu.memory_space<vmem>>, %arg2: memref<32x32xf32, #tpu.memory_space<vmem>>, %arg3: memref<32x32xf32, #tpu.memory_space<vmem>>, %arg4: memref<1x32xf32, #tpu.memory_space<vmem>>, %arg5: memref<1x32xf32, #tpu.memory_space<vmem>>, %arg6: memref<32x96xbf16, #tpu.memory_space<vmem>>, %arg7: memref<1x96xf32, #tpu.memory_space<vmem>>, %arg8: memref<1x64x32xbf16, #tpu.memory_space<vmem>>, %arg9: memref<1x64x32xbf16, #tpu.memory_space<vmem>>, %arg10: memref<1x64x32xbf16, #tpu.memory_space<vmem>>) attributes {dimension_semantics = [#tpu.dimension_semantics<parallel>], iteration_bounds = array<i64: 2>, scalar_prefetch = 0 : i64, scratch_operands = 0 : i64, tpu.core_type = #tpu.core_type<tc>, window_params = [{transform_indices = @transform_0, window_bounds = array<i64: 1, 64, 32>}, {pipeline_mode = #tpu.pipeline_mode<synchronous>, transform_indices = @transform_1, window_bounds = array<i64: 32, 32>}, {pipeline_mode = #tpu.pipeline_mode<synchronous>, transform_indices = @transform_2, window_bounds = array<i64: 32, 32>}, {pipeline_mode = #tpu.pipeline_mode<synchronous>, transform_indices = @transform_3, window_bounds = array<i64: 1, 32>}, {pipeline_mode = #tpu.pipeline_mode<synchronous>, transform_indices = @transform_4, window_bounds = array<i64: 1, 32>}, {pipeline_mode = #tpu.pipeline_mode<synchronous>, transform_indices = @transform_5, window_bounds = array<i64: 32, 96>}, {pipeline_mode = #tpu.pipeline_mode<synchronous>, transform_indices = @transform_6, window_bounds = array<i64: 1, 96>}, {transform_indices = @transform_7, window_bounds = array<i64: 1, 64, 32>}, {transform_indices = @transform_8, window_bounds = array<i64: 1, 64, 32>}, {transform_indices = @transform_9, window_bounds = array<i64: 1, 64, 32>}]} {
    %c0 = arith.constant 0 : index
    %c0_0 = arith.constant 0 : index
    %c0_1 = arith.constant 0 : index
    %0 = vector.load %arg1[%c0, %c0_0, %c0_1] : memref<1x64x32xf32, #tpu.memory_space<vmem>>, vector<1x64x32xf32>
    %1 = vector.shape_cast %0 : vector<1x64x32xf32> to vector<64x32xf32>
    %cst = arith.constant dense<0.000000e+00> : vector<32xf32>
    %2 = vector.multi_reduction <add>, %1, %cst [0] : vector<64x32xf32> to vector<32xf32>
    %3 = vector.shape_cast %2 : vector<32xf32> to vector<1x32xf32>
    %4 = arith.mulf %1, %1 : vector<64x32xf32>
    %cst_2 = arith.constant dense<0.000000e+00> : vector<32xf32>
    %5 = vector.multi_reduction <add>, %4, %cst_2 [0] : vector<64x32xf32> to vector<32xf32>
    %6 = vector.shape_cast %5 : vector<32xf32> to vector<1x32xf32>
    %7 = tpu.concatenate %3, %6 in 0 : vector<1x32xf32>, vector<1x32xf32> -> vector<2x32xf32>
    %c0_3 = arith.constant 0 : index
    %c0_4 = arith.constant 0 : index
    %8 = vector.load %arg2[%c0_3, %c0_4] : memref<32x32xf32, #tpu.memory_space<vmem>>, vector<32x32xf32>
    %cst_5 = arith.constant dense<0.000000e+00> : vector<2x32xf32>
    %9 = tpu.matmul %7, %8, %cst_5 {dimension_numbers = #tpu.dot_dimension_numbers<[1], [0], [0], [1], [0, 0, 1, 1], [], []>} : vector<2x32xf32>, vector<32x32xf32>, vector<2x32xf32> -> vector<2x32xf32>
    %cst_6 = arith.constant 1.562500e-02 : f32
    %10 = vector.broadcast %cst_6 : f32 to vector<2x32xf32>
    %11 = arith.mulf %9, %10 : vector<2x32xf32>
    %c0_7 = arith.constant 0 : index
    %c0_8 = arith.constant 0 : index
    %12 = vector.load %arg3[%c0_7, %c0_8] : memref<32x32xf32, #tpu.memory_space<vmem>>, vector<32x32xf32>
    %cst_9 = arith.constant dense<0.000000e+00> : vector<2x32xf32>
    %13 = tpu.matmul %11, %12, %cst_9 {dimension_numbers = #tpu.dot_dimension_numbers<[1], [0], [0], [1], [0, 0, 1, 1], [], []>} : vector<2x32xf32>, vector<32x32xf32>, vector<2x32xf32> -> vector<2x32xf32>
    %14 = vector.extract_strided_slice %13 {offsets = [0, 0], sizes = [1, 32], strides = [1, 1]} : vector<2x32xf32> to vector<1x32xf32>
    %15 = vector.extract_strided_slice %13 {offsets = [1, 0], sizes = [1, 32], strides = [1, 1]} : vector<2x32xf32> to vector<1x32xf32>
    %16 = arith.mulf %14, %14 : vector<1x32xf32>
    %17 = arith.subf %15, %16 : vector<1x32xf32>
    %cst_10 = arith.constant 0.000000e+00 : f32
    %18 = vector.broadcast %cst_10 : f32 to vector<1x32xf32>
    %19 = arith.maximumf %17, %18 : vector<1x32xf32>
    %cst_11 = arith.constant 9.99999974E-6 : f32
    %20 = vector.broadcast %cst_11 : f32 to vector<1x32xf32>
    %21 = arith.addf %19, %20 : vector<1x32xf32>
    %22 = math.rsqrt %21 : vector<1x32xf32>
    %23 = vector.broadcast %14 : vector<1x32xf32> to vector<64x32xf32>
    %24 = arith.subf %1, %23 : vector<64x32xf32>
    %c0_12 = arith.constant 0 : index
    %c0_13 = arith.constant 0 : index
    %25 = vector.load %arg4[%c0_12, %c0_13] : memref<1x32xf32, #tpu.memory_space<vmem>>, vector<1x32xf32>
    %26 = arith.mulf %22, %25 : vector<1x32xf32>
    %27 = vector.broadcast %26 : vector<1x32xf32> to vector<64x32xf32>
    %28 = arith.mulf %24, %27 : vector<64x32xf32>
    %c0_14 = arith.constant 0 : index
    %c0_15 = arith.constant 0 : index
    %29 = vector.load %arg5[%c0_14, %c0_15] : memref<1x32xf32, #tpu.memory_space<vmem>>, vector<1x32xf32>
    %30 = vector.broadcast %29 : vector<1x32xf32> to vector<64x32xf32>
    %31 = arith.addf %28, %30 : vector<64x32xf32>
    %32 = arith.truncf %31 : vector<64x32xf32> to vector<64x32xbf16>
    %c0_16 = arith.constant 0 : index
    %c0_17 = arith.constant 0 : index
    %33 = vector.load %arg6[%c0_16, %c0_17] : memref<32x96xbf16, #tpu.memory_space<vmem>>, vector<32x96xbf16>
    %cst_18 = arith.constant dense<0.000000e+00> : vector<64x96xf32>
    %34 = tpu.matmul %32, %33, %cst_18 {dimension_numbers = #tpu.dot_dimension_numbers<[1], [0], [0], [1], [0, 0, 1, 1], [], []>} : vector<64x32xbf16>, vector<32x96xbf16>, vector<64x96xf32> -> vector<64x96xf32>
    %c0_19 = arith.constant 0 : index
    %c0_20 = arith.constant 0 : index
    %35 = vector.load %arg7[%c0_19, %c0_20] : memref<1x96xf32, #tpu.memory_space<vmem>>, vector<1x96xf32>
    %36 = vector.broadcast %35 : vector<1x96xf32> to vector<64x96xf32>
    %37 = arith.addf %34, %36 : vector<64x96xf32>
    %38 = vector.extract_strided_slice %37 {offsets = [0, 0], sizes = [64, 32], strides = [1, 1]} : vector<64x96xf32> to vector<64x32xf32>
    %39 = arith.truncf %38 : vector<64x32xf32> to vector<64x32xbf16>
    %c0_21 = arith.constant 0 : index
    %c0_22 = arith.constant 0 : index
    %c0_23 = arith.constant 0 : index
    %40 = vector.load %arg8[%c0_21, %c0_22, %c0_23] : memref<1x64x32xbf16, #tpu.memory_space<vmem>>, vector<1x64x32xbf16>
    %41 = vector.shape_cast %40 : vector<1x64x32xbf16> to vector<64x32xbf16>
    %42 = vector.shape_cast %39 : vector<64x32xbf16> to vector<1x64x32xbf16>
    tpu.vector_store %arg8[%c0_21, %c0_22, %c0_23], %42 {strides = array<i32>} : memref<1x64x32xbf16, #tpu.memory_space<vmem>>, vector<1x64x32xbf16>,
    %43 = vector.extract_strided_slice %37 {offsets = [0, 32], sizes = [64, 32], strides = [1, 1]} : vector<64x96xf32> to vector<64x32xf32>
    %44 = arith.truncf %43 : vector<64x32xf32> to vector<64x32xbf16>
    %c0_24 = arith.constant 0 : index
    %c0_25 = arith.constant 0 : index
    %c0_26 = arith.constant 0 : index
    %45 = vector.load %arg9[%c0_24, %c0_25, %c0_26] : memref<1x64x32xbf16, #tpu.memory_space<vmem>>, vector<1x64x32xbf16>
    %46 = vector.shape_cast %45 : vector<1x64x32xbf16> to vector<64x32xbf16>
    %47 = vector.shape_cast %44 : vector<64x32xbf16> to vector<1x64x32xbf16>
    tpu.vector_store %arg9[%c0_24, %c0_25, %c0_26], %47 {strides = array<i32>} : memref<1x64x32xbf16, #tpu.memory_space<vmem>>, vector<1x64x32xbf16>,
    %48 = vector.extract_strided_slice %37 {offsets = [0, 64], sizes = [64, 32], strides = [1, 1]} : vector<64x96xf32> to vector<64x32xf32>
    %49 = arith.truncf %48 : vector<64x32xf32> to vector<64x32xbf16>
    %c0_27 = arith.constant 0 : index
    %c0_28 = arith.constant 0 : index
    %c0_29 = arith.constant 0 : index
    %50 = vector.load %arg10[%c0_27, %c0_28, %c0_29] : memref<1x64x32xbf16, #tpu.memory_space<vmem>>, vector<1x64x32xbf16>
    %51 = vector.shape_cast %50 : vector<1x64x32xbf16> to vector<64x32xbf16>
    %52 = vector.shape_cast %49 : vector<64x32xbf16> to vector<1x64x32xbf16>
    tpu.vector_store %arg10[%c0_27, %c0_28, %c0_29], %52 {strides = array<i32>} : memref<1x64x32xbf16, #tpu.memory_space<vmem>>, vector<1x64x32xbf16>,
    return
  }
  func.func @transform_0(%arg0: i32) -> (i32, i32, i32) {
    %c0_i32 = arith.constant 0 : i32
    %c0_i32_0 = arith.constant 0 : i32
    %c0_i32_1 = arith.constant 0 : i32
    return %arg0, %c0_i32, %c0_i32_0 : i32, i32, i32
  }
  func.func @transform_1(%arg0: i32) -> (i32, i32) {
    %c0_i32 = arith.constant 0 : i32
    %c0_i32_0 = arith.constant 0 : i32
    %c0_i32_1 = arith.constant 0 : i32
    return %c0_i32, %c0_i32_0 : i32, i32
  }
  func.func @transform_2(%arg0: i32) -> (i32, i32) {
    %c0_i32 = arith.constant 0 : i32
    %c0_i32_0 = arith.constant 0 : i32
    %c0_i32_1 = arith.constant 0 : i32
    return %c0_i32, %c0_i32_0 : i32, i32
  }
  func.func @transform_3(%arg0: i32) -> (i32, i32) {
    %c0_i32 = arith.constant 0 : i32
    %c0_i32_0 = arith.constant 0 : i32
    %c0_i32_1 = arith.constant 0 : i32
    return %c0_i32, %c0_i32_0 : i32, i32
  }
  func.func @transform_4(%arg0: i32) -> (i32, i32) {
    %c0_i32 = arith.constant 0 : i32
    %c0_i32_0 = arith.constant 0 : i32
    %c0_i32_1 = arith.constant 0 : i32
    return %c0_i32, %c0_i32_0 : i32, i32
  }
  func.func @transform_5(%arg0: i32) -> (i32, i32) {
    %c0_i32 = arith.constant 0 : i32
    %c0_i32_0 = arith.constant 0 : i32
    %c0_i32_1 = arith.constant 0 : i32
    return %c0_i32, %c0_i32_0 : i32, i32
  }
  func.func @transform_6(%arg0: i32) -> (i32, i32) {
    %c0_i32 = arith.constant 0 : i32
    %c0_i32_0 = arith.constant 0 : i32
    %c0_i32_1 = arith.constant 0 : i32
    return %c0_i32, %c0_i32_0 : i32, i32
  }
  func.func @transform_7(%arg0: i32) -> (i32, i32, i32) {
    %c0_i32 = arith.constant 0 : i32
    %c0_i32_0 = arith.constant 0 : i32
    %c0_i32_1 = arith.constant 0 : i32
    return %arg0, %c0_i32, %c0_i32_0 : i32, i32, i32
  }
  func.func @transform_8(%arg0: i32) -> (i32, i32, i32) {
    %c0_i32 = arith.constant 0 : i32
    %c0_i32_0 = arith.constant 0 : i32
    %c0_i32_1 = arith.constant 0 : i32
    return %arg0, %c0_i32, %c0_i32_0 : i32, i32, i32
  }
  func.func @transform_9(%arg0: i32) -> (i32, i32, i32) {
    %c0_i32 = arith.constant 0 : i32
    %c0_i32_0 = arith.constant 0 : i32
    %c0_i32_1 = arith.constant 0 : i32
    return %arg0, %c0_i32, %c0_i32_0 : i32, i32, i32
  }
}

</mosaic_0001>

<llo_original>
// kernel: tpu_custom_call.1
$region0: #{tpu_custom_call.1}
  #allocation0 [shape = 'u32[]', space=smem, size = 0x4, offset = 0x4, fixed_abs, tag = 'smem constant byte address 0x4 - core index']
  #allocation1 [shape = 'u32[144,128]{1,0:T(1,128)}', space=vmem, size = 0x12000, scoped, tag = 'internal scratch']
  %s0 = inlined_call_operand.hbm [shape: f32[2,64,32], index: 0, kind: input, shape index: {}]
  %s1 = inlined_call_operand.hbm [shape: f32[32,32], index: 1, kind: input, shape index: {}]
  %s2 = inlined_call_operand.hbm [shape: f32[32,32], index: 2, kind: input, shape index: {}]
  %s3 = inlined_call_operand.hbm [shape: f32[1,32], index: 3, kind: input, shape index: {}]
  %s4 = inlined_call_operand.hbm [shape: f32[1,32], index: 4, kind: input, shape index: {}]
  %s5 = inlined_call_operand.hbm [shape: bf16[32,96], index: 5, kind: input, shape index: {}]
  %s6 = inlined_call_operand.hbm [shape: f32[1,96], index: 6, kind: input, shape index: {}]
  %s7 = inlined_call_operand.hbm [shape: bf16[2,64,32], index: 7, kind: output, shape index: {0}]
  %s8 = inlined_call_operand.hbm [shape: bf16[2,64,32], index: 8, kind: output, shape index: {1}]
  %s9 = inlined_call_operand.hbm [shape: bf16[2,64,32], index: 9, kind: output, shape index: {2}]
  %10 = xla_tuple %s7, %s8, %s9
  %s11 = sld [smem:[#allocation0]]
  $region105: #{tpu_custom_call.1} parent=0
    _
  %s13 = ssub.s32 1, %s11
  %s14 = scalar_select 0, %s13, %s11
  $region1: #{tpu_custom_call.1} parent=0
    #allocation2 [shape = 'u8[65536]{0}', space=vmem, size = 0x10000, scoped, tag = 'input window, operand 0']
    #allocation3 [shape = 's32[2]{0}', space=sflag, size = 0x8, scoped, tag = 'scoped memory for tpu_custom_call.1']
    #allocation4 [shape = 's32[2]{0}', space=sflag, size = 0x8, scoped, tag = 'scoped memory for tpu_custom_call.1']
    #allocation5 [shape = 'u8[16384]{0}', space=vmem, size = 0x4000, scoped, tag = 'input window, operand 1, single buffered']
    #allocation6 [shape = 's32[1]{0}', space=sflag, size = 0x4, scoped, tag = 'scoped memory for tpu_custom_call.1']
    #allocation7 [shape = 'u8[16384]{0}', space=vmem, size = 0x4000, scoped, tag = 'input window, operand 2, single buffered']
    #allocation8 [shape = 'u8[512]{0}', space=vmem, size = 0x400, scoped, tag = 'input window, operand 3, single buffered']
    #allocation9 [shape = 's32[1]{0}', space=sflag, size = 0x4, scoped, tag = 'scoped memory for tpu_custom_call.1']
    #allocation10 [shape = 'u8[512]{0}', space=vmem, size = 0x400, scoped, tag = 'input window, operand 4, single buffered']
    #allocation11 [shape = 'u8[8192]{0}', space=vmem, size = 0x2000, scoped, tag = 'input window, operand 5, single buffered']
    #allocation12 [shape = 's32[1]{0}', space=sflag, size = 0x4, scoped, tag = 'scoped memory for tpu_custom_call.1']
    #allocation13 [shape = 'u8[512]{0}', space=vmem, size = 0x400, scoped, tag = 'input window, operand 6, single buffered']
    #allocation14 [shape = 'u8[32768]{0}', space=vmem, size = 0x8000, scoped, tag = 'output window, operand 0']
    #allocation15 [shape = 'u8[32768]{0}', space=vmem, size = 0x8000, scoped, tag = 'output window, operand 1']
    #allocation16 [shape = 's32[2]{0}', space=sflag, size = 0x8, scoped, tag = 'scoped memory for tpu_custom_call.1']
    #allocation17 [shape = 'u8[32768]{0}', space=vmem, size = 0x8000, scoped, tag = 'output window, operand 2']
    %15 = vsyncpa [#allocation3], 0
    %s16 = scalar_lea.sflag [#allocation3], 1
    %17 = vsyncpa %s16, 0
    %18 = vsyncpa [#allocation6], 0
    %19 = vsyncpa [#allocation9], 0
    %20 = vsyncpa [#allocation12], 0
    %21 = vsyncpa [#allocation4], 0
    %s22 = scalar_lea.sflag [#allocation4], 1
    %23 = vsyncpa %s22, 0
    %24 = vsyncpa [#allocation16], 0
    %s25 = scalar_lea.sflag [#allocation16], 1
    %26 = vsyncpa %s25, 0
    loop: start=0, step=1, limit=4
    $region2: #{tpu_custom_call.1} parent=1 // loop_pre_header
      _
    $region3: #{tpu_custom_call.1} parent=1 // loop_header
      %s28 = sphi 0, %s32
      %p29 = scmp.ge.s32.totalorder %s28, 4
      %s38 = sphi 0, %s40
      %s41 = sphi 0, %s38
      %s42 = sphi 0, %s41
      %s58 = sphi 0, %s42
      %s62 = sphi 0, %s62
      %s64 = sphi 0, %s62
      %s65 = sphi 0, %s64
      %s79 = sphi 0, %s65
      %s83 = sphi 0, %s83
      %s85 = sphi 0, %s83
      %s86 = sphi 0, %s85
      %s100 = sphi 0, %s86
      %s104 = sphi 0, %s104
      %s106 = sphi 0, %s104
      %s107 = sphi 0, %s106
      %s121 = sphi 0, %s107
      %s125 = sphi 0, %s125
      %s127 = sphi 0, %s125
      %s128 = sphi 0, %s127
      %s142 = sphi 0, %s128
      %s146 = sphi 0, %s146
      %s148 = sphi 0, %s146
      %s149 = sphi 0, %s148
      %s163 = sphi 0, %s149
      %s167 = sphi 0, %s167
      %s169 = sphi 0, %s167
      %s170 = sphi 0, %s169
      %s184 = sphi 0, %s170
      %s190 = sphi 0, %s192
      %s193 = sphi 0, %s190
      %s194 = sphi 0, %s193
      %s210 = sphi 0, %s194
      %s216 = sphi 0, %s218
      %s219 = sphi 0, %s216
      %s220 = sphi 0, %s219
      %s236 = sphi 0, %s220
      %s242 = sphi 0, %s244
      %s245 = sphi 0, %s242
      %s246 = sphi 0, %s245
      %s262 = sphi 0, %s246
    $region4: #{tpu_custom_call.1} parent=1 // loop_header_branch
      %31 = sbr.rel (%p29) target = $region8
    $region5: #{tpu_custom_call.1} parent=1 // loop_body
      %s33 = ssub.s32 %s28, 1
      %s34 = ssub.s32 %s28, 2
      %s35 = sadd.s32 %s28, 1
      %s36 = ssub.s32 %s28, %s35
      %p37 = scmp.eq.s32.totalorder %s36, 0
      %s39 = sadd.s32 %s38, 1
      %s40 = scalar_select %p37, %s38, %s39
      %p43 = pneg %p37
      %p44 = scmp.eq.s32.totalorder %s28, 1
      %p45 = por %p43, %p44
      %p46 = scmp.ne.s32.totalorder %s38, %s41
      %p47 = scmp.eq.s32.totalorder %s28, 0
      %p48 = por %p46, %p47
      %p49 = scmp.ne.s32.totalorder %s38, %s41
      %p50 = scmp.eq.s32.totalorder %s33, 1
      %p51 = por %p49, %p50
      %p52 = scmp.ne.s32.totalorder %s41, %s42
      %p53 = scmp.eq.s32.totalorder %s33, 0
      %p54 = por %p52, %p53
      %p55 = scmp.ne.s32.totalorder %s41, %s42
      %p56 = scmp.eq.s32.totalorder %s34, 1
      %p57 = por %p55, %p56
      %p59 = scmp.ne.s32.totalorder %s42, %s58
      %p60 = scmp.eq.s32.totalorder %s34, 0
      %p61 = por %p59, %p60
      %s63 = sadd.s32 %s62, 1
      %p66 = scmp.eq.s32.totalorder %s28, 1
      %p67 = scmp.ne.s32.totalorder %s62, %s64
      %p68 = scmp.eq.s32.totalorder %s28, 0
      %p69 = por %p67, %p68
      %p70 = scmp.ne.s32.totalorder %s62, %s64
      %p71 = scmp.eq.s32.totalorder %s33, 1
      %p72 = por %p70, %p71
      %p73 = scmp.ne.s32.totalorder %s64, %s65
      %p74 = scmp.eq.s32.totalorder %s33, 0
      %p75 = por %p73, %p74
      %p76 = scmp.ne.s32.totalorder %s64, %s65
      %p77 = scmp.eq.s32.totalorder %s34, 1
      %p78 = por %p76, %p77
      %p80 = scmp.ne.s32.totalorder %s65, %s79
      %p81 = scmp.eq.s32.totalorder %s34, 0
      %p82 = por %p80, %p81
      %s84 = sadd.s32 %s83, 1
      %p87 = scmp.eq.s32.totalorder %s28, 1
      %p88 = scmp.ne.s32.totalorder %s83, %s85
      %p89 = scmp.eq.s32.totalorder %s28, 0
      %p90 = por %p88, %p89
      %p91 = scmp.ne.s32.totalorder %s83, %s85
      %p92 = scmp.eq.s32.totalorder %s33, 1
      %p93 = por %p91, %p92
      %p94 = scmp.ne.s32.totalorder %s85, %s86
      %p95 = scmp.eq.s32.totalorder %s33, 0
      %p96 = por %p94, %p95
      %p97 = scmp.ne.s32.totalorder %s85, %s86
      %p98 = scmp.eq.s32.totalorder %s34, 1
      %p99 = por %p97, %p98
      %p101 = scmp.ne.s32.totalorder %s86, %s100
      %p102 = scmp.eq.s32.totalorder %s34, 0
      %p103 = por %p101, %p102
      %s105 = sadd.s32 %s104, 1
      %p108 = scmp.eq.s32.totalorder %s28, 1
      %p109 = scmp.ne.s32.totalorder %s104, %s106
      %p110 = scmp.eq.s32.totalorder %s28, 0
      %p111 = por %p109, %p110
      %p112 = scmp.ne.s32.totalorder %s104, %s106
      %p113 = scmp.eq.s32.totalorder %s33, 1
      %p114 = por %p112, %p113
      %p115 = scmp.ne.s32.totalorder %s106, %s107
      %p116 = scmp.eq.s32.totalorder %s33, 0
      %p117 = por %p115, %p116
      %p118 = scmp.ne.s32.totalorder %s106, %s107
      %p119 = scmp.eq.s32.totalorder %s34, 1
      %p120 = por %p118, %p119
      %p122 = scmp.ne.s32.totalorder %s107, %s121
      %p123 = scmp.eq.s32.totalorder %s34, 0
      %p124 = por %p122, %p123
      %s126 = sadd.s32 %s125, 1
      %p129 = scmp.eq.s32.totalorder %s28, 1
      %p130 = scmp.ne.s32.totalorder %s125, %s127
      %p131 = scmp.eq.s32.totalorder %s28, 0
      %p132 = por %p130, %p131
      %p133 = scmp.ne.s32.totalorder %s125, %s127
      %p134 = scmp.eq.s32.totalorder %s33, 1
      %p135 = por %p133, %p134
      %p136 = scmp.ne.s32.totalorder %s127, %s128
      %p137 = scmp.eq.s32.totalorder %s33, 0
      %p138 = por %p136, %p137
      %p139 = scmp.ne.s32.totalorder %s127, %s128
      %p140 = scmp.eq.s32.totalorder %s34, 1
      %p141 = por %p139, %p140
      %p143 = scmp.ne.s32.totalorder %s128, %s142
      %p144 = scmp.eq.s32.totalorder %s34, 0
      %p145 = por %p143, %p144
      %s147 = sadd.s32 %s146, 1
      %p150 = scmp.eq.s32.totalorder %s28, 1
      %p151 = scmp.ne.s32.totalorder %s146, %s148
      %p152 = scmp.eq.s32.totalorder %s28, 0
      %p153 = por %p151, %p152
      %p154 = scmp.ne.s32.totalorder %s146, %s148
      %p155 = scmp.eq.s32.totalorder %s33, 1
      %p156 = por %p154, %p155
      %p157 = scmp.ne.s32.totalorder %s148, %s149
      %p158 = scmp.eq.s32.totalorder %s33, 0
      %p159 = por %p157, %p158
      %p160 = scmp.ne.s32.totalorder %s148, %s149
      %p161 = scmp.eq.s32.totalorder %s34, 1
      %p162 = por %p160, %p161
      %p164 = scmp.ne.s32.totalorder %s149, %s163
      %p165 = scmp.eq.s32.totalorder %s34, 0
      %p166 = por %p164, %p165
      %s168 = sadd.s32 %s167, 1
      %p171 = scmp.eq.s32.totalorder %s28, 1
      %p172 = scmp.ne.s32.totalorder %s167, %s169
      %p173 = scmp.eq.s32.totalorder %s28, 0
      %p174 = por %p172, %p173
      %p175 = scmp.ne.s32.totalorder %s167, %s169
      %p176 = scmp.eq.s32.totalorder %s33, 1
      %p177 = por %p175, %p176
      %p178 = scmp.ne.s32.totalorder %s169, %s170
      %p179 = scmp.eq.s32.totalorder %s33, 0
      %p180 = por %p178, %p179
      %p181 = scmp.ne.s32.totalorder %s169, %s170
      %p182 = scmp.eq.s32.totalorder %s34, 1
      %p183 = por %p181, %p182
      %p185 = scmp.ne.s32.totalorder %s170, %s184
      %p186 = scmp.eq.s32.totalorder %s34, 0
      %p187 = por %p185, %p186
      %s188 = ssub.s32 %s28, %s35
      %p189 = scmp.eq.s32.totalorder %s188, 0
      %s191 = sadd.s32 %s190, 1
      %s192 = scalar_select %p189, %s190, %s191
      %p195 = pneg %p189
      %p196 = scmp.eq.s32.totalorder %s28, 1
      %p197 = por %p195, %p196
      %p198 = scmp.ne.s32.totalorder %s190, %s193
      %p199 = scmp.eq.s32.totalorder %s28, 0
      %p200 = por %p198, %p199
      %p201 = scmp.ne.s32.totalorder %s190, %s193
      %p202 = scmp.eq.s32.totalorder %s33, 1
      %p203 = por %p201, %p202
      %p204 = scmp.ne.s32.totalorder %s193, %s194
      %p205 = scmp.eq.s32.totalorder %s33, 0
      %p206 = por %p204, %p205
      %p207 = scmp.ne.s32.totalorder %s193, %s194
      %p208 = scmp.eq.s32.totalorder %s34, 1
      %p209 = por %p207, %p208
      %p211 = scmp.ne.s32.totalorder %s194, %s210
      %p212 = scmp.eq.s32.totalorder %s34, 0
      %p213 = por %p211, %p212
      %s214 = ssub.s32 %s28, %s35
      %p215 = scmp.eq.s32.totalorder %s214, 0
      %s217 = sadd.s32 %s216, 1
      %s218 = scalar_select %p215, %s216, %s217
      %p221 = pneg %p215
      %p222 = scmp.eq.s32.totalorder %s28, 1
      %p223 = por %p221, %p222
      %p224 = scmp.ne.s32.totalorder %s216, %s219
      %p225 = scmp.eq.s32.totalorder %s28, 0
      %p226 = por %p224, %p225
      %p227 = scmp.ne.s32.totalorder %s216, %s219
      %p228 = scmp.eq.s32.totalorder %s33, 1
      %p229 = por %p227, %p228
      %p230 = scmp.ne.s32.totalorder %s219, %s220
      %p231 = scmp.eq.s32.totalorder %s33, 0
      %p232 = por %p230, %p231
      %p233 = scmp.ne.s32.totalorder %s219, %s220
      %p234 = scmp.eq.s32.totalorder %s34, 1
      %p235 = por %p233, %p234
      %p237 = scmp.ne.s32.totalorder %s220, %s236
      %p238 = scmp.eq.s32.totalorder %s34, 0
      %p239 = por %p237, %p238
      %s240 = ssub.s32 %s28, %s35
      %p241 = scmp.eq.s32.totalorder %s240, 0
      %s243 = sadd.s32 %s242, 1
      %s244 = scalar_select %p241, %s242, %s243
      %p247 = pneg %p241
      %p248 = scmp.eq.s32.totalorder %s28, 1
      %p249 = por %p247, %p248
      %p250 = scmp.ne.s32.totalorder %s242, %s245
      %p251 = scmp.eq.s32.totalorder %s28, 0
      %p252 = por %p250, %p251
      %p253 = scmp.ne.s32.totalorder %s242, %s245
      %p254 = scmp.eq.s32.totalorder %s33, 1
      %p255 = por %p253, %p254
      %p256 = scmp.ne.s32.totalorder %s245, %s246
      %p257 = scmp.eq.s32.totalorder %s33, 0
      %p258 = por %p256, %p257
      %p259 = scmp.ne.s32.totalorder %s245, %s246
      %p260 = scmp.eq.s32.totalorder %s34, 1
      %p261 = por %p259, %p260
      %p263 = scmp.ne.s32.totalorder %s246, %s262
      %p264 = scmp.eq.s32.totalorder %s34, 0
      %p265 = por %p263, %p264
      %p266 = scmp.le.s32.totalorder 1, %s28
      %p267 = scmp.lt.s32.totalorder %s28, 3
      %p268 = pnand %p266, %p267
      %p269 = pneg %p268
      // Predicated region
      $region9: #{tpu_custom_call.1} parent=5 // pred_check
        _
      $region10: #{tpu_custom_call.1} parent=5 // pred_check_branch
        %271 = sbr.rel (%p268) target = $region12
      $region11: #{tpu_custom_call.1} parent=5 // pred_region
        %s272 = ssub.s32 %s28, 1
        // Predicated region
        $region13: #{tpu_custom_call.1} parent=11 // pred_check
          %p273 = pneg %p75
        $region14: #{tpu_custom_call.1} parent=11 // pred_check_branch
          %275 = sbr.rel (%p273) target = $region16
        $region15: #{tpu_custom_call.1} parent=11 // pred_region
          %s277 = ssub.s32 512, 512
          %278 = vsyncadd [#allocation6], %s277
          %s279 = sshll.u32 [#allocation5], 4
          %s280 = int_to_ptr.vmem [resolvable:$true] %s279
          %285 = dma.hbm_to_vmem [thread:$0]  %s1, 512, %s280, [#allocation6], 128, 128, 8
        $region16: #{tpu_custom_call.1} parent=11 // pred_fallthru
          _
        // Predicated region
        $region17: #{tpu_custom_call.1} parent=11 // pred_check
          %p286 = pneg %p96
        $region18: #{tpu_custom_call.1} parent=11 // pred_check_branch
          %288 = sbr.rel (%p286) target = $region20
        $region19: #{tpu_custom_call.1} parent=11 // pred_region
          %s290 = ssub.s32 512, 512
          %291 = vsyncadd [#allocation6], %s290
          %s292 = sshll.u32 [#allocation7], 4
          %s293 = int_to_ptr.vmem [resolvable:$true] %s292
          %298 = dma.hbm_to_vmem [thread:$0]  %s2, 512, %s293, [#allocation6], 128, 128, 8
        $region20: #{tpu_custom_call.1} parent=11 // pred_fallthru
          _
        // Predicated region
        $region21: #{tpu_custom_call.1} parent=11 // pred_check
          %p299 = pneg %p117
        $region22: #{tpu_custom_call.1} parent=11 // pred_check_branch
          %301 = sbr.rel (%p299) target = $region24
        $region23: #{tpu_custom_call.1} parent=11 // pred_region
          %s303 = ssub.s32 16, 16
          %304 = vsyncadd [#allocation9], %s303
          %s306 = sshll.u32 [#allocation8], 4
          %s307 = int_to_ptr.vmem [resolvable:$true] %s306
          %309 = dma.hbm_to_vmem [thread:$0]  %s3, 16, %s307, [#allocation9]
        $region24: #{tpu_custom_call.1} parent=11 // pred_fallthru
          _
        // Predicated region
        $region25: #{tpu_custom_call.1} parent=11 // pred_check
          %p310 = pneg %p138
        $region26: #{tpu_custom_call.1} parent=11 // pred_check_branch
          %312 = sbr.rel (%p310) target = $region28
        $region27: #{tpu_custom_call.1} parent=11 // pred_region
          %s314 = ssub.s32 16, 16
          %315 = vsyncadd [#allocation9], %s314
          %s317 = sshll.u32 [#allocation10], 4
          %s318 = int_to_ptr.vmem [resolvable:$true] %s317
          %320 = dma.hbm_to_vmem [thread:$0]  %s4, 16, %s318, [#allocation9]
        $region28: #{tpu_custom_call.1} parent=11 // pred_fallthru
          _
        // Predicated region
        $region29: #{tpu_custom_call.1} parent=11 // pred_check
          %p321 = pneg %p159
        $region30: #{tpu_custom_call.1} parent=11 // pred_check_branch
          %323 = sbr.rel (%p321) target = $region32
        $region31: #{tpu_custom_call.1} parent=11 // pred_region
          %s325 = ssub.s32 256, 256
          %326 = vsyncadd [#allocation12], %s325
          %s327 = sshll.u32 [#allocation11], 4
          %s328 = int_to_ptr.vmem [resolvable:$true] %s327
          %333 = dma.hbm_to_vmem [thread:$0]  %s5, 256, %s328, [#allocation12], 64, 64, 4
        $region32: #{tpu_custom_call.1} parent=11 // pred_fallthru
          _
        // Predicated region
        $region33: #{tpu_custom_call.1} parent=11 // pred_check
          %p334 = pneg %p180
        $region34: #{tpu_custom_call.1} parent=11 // pred_check_branch
          %336 = sbr.rel (%p334) target = $region36
        $region35: #{tpu_custom_call.1} parent=11 // pred_region
          %s338 = ssub.s32 16, 16
          %339 = vsyncadd [#allocation12], %s338
          %s341 = sshll.u32 [#allocation13], 4
          %s342 = int_to_ptr.vmem [resolvable:$true] %s341
          %344 = dma.hbm_to_vmem [thread:$0]  %s6, 16, %s342, [#allocation12]
        $region36: #{tpu_custom_call.1} parent=11 // pred_fallthru
          _
      $region12: #{tpu_custom_call.1} parent=5 // pred_fallthru
        _
      %p345 = scmp.lt.s32.totalorder %s28, 2
      // Predicated region
      $region37: #{tpu_custom_call.1} parent=5 // pred_check
        %p346 = pneg %p345
      $region38: #{tpu_custom_call.1} parent=5 // pred_check_branch
        %348 = sbr.rel (%p346) target = $region40
      $region39: #{tpu_custom_call.1} parent=5 // pred_region
        // Predicated region
        $region41: #{tpu_custom_call.1} parent=39 // pred_check
          %p349 = pneg %p48
        $region42: #{tpu_custom_call.1} parent=39 // pred_check_branch
          %351 = sbr.rel (%p349) target = $region44
        $region43: #{tpu_custom_call.1} parent=39 // pred_region
          %s352 = sand.u32 %s38, 1
          %s353 = scalar_lea.sflag [#allocation3], %s352
          %s354 = sand.u32 %s38, 1
          %s355 = smul.addr %s354, 64
          %s356 = scalar_lea.vmem [#allocation2], %s355
          %s358 = ssub.s32 1024, 1024
          %359 = vsyncadd %s353, %s358
          %s360 = smul.addr %s28, 8
          %s361 = smul.addr %s360, 128
          %s362 = scalar_lea.hbm %s0, %s361
          %s363 = sshll.u32 %s356, 4
          %s364 = int_to_ptr.vmem [resolvable:$true] %s363
          %369 = dma.hbm_to_vmem [thread:$0]  %s362, 1024, %s364, %s353, 128, 128, 8
        $region44: #{tpu_custom_call.1} parent=39 // pred_fallthru
          _
      $region40: #{tpu_custom_call.1} parent=5 // pred_fallthru
        _
      %p370 = scmp.le.s32.totalorder 1, %s28
      %p371 = scmp.lt.s32.totalorder %s28, 3
      %p372 = pnand %p370, %p371
      %p373 = pneg %p372
      // Predicated region
      $region45: #{tpu_custom_call.1} parent=5 // pred_check
        _
      $region46: #{tpu_custom_call.1} parent=5 // pred_check_branch
        %375 = sbr.rel (%p372) target = $region48
      $region47: #{tpu_custom_call.1} parent=5 // pred_region
        %s376 = ssub.s32 %s28, 1
        %s377 = sand.u32 %s41, 1
        %s378 = scalar_lea.sflag [#allocation3], %s377
        %s379 = sand.u32 %s41, 1
        %s380 = smul.addr %s379, 64
        %s381 = scalar_lea.vmem [#allocation2], %s380
        // Predicated region
        $region49: #{tpu_custom_call.1} parent=47 // pred_check
          %p382 = pneg %p54
        $region50: #{tpu_custom_call.1} parent=47 // pred_check_branch
          %384 = sbr.rel (%p382) target = $region52
        $region51: #{tpu_custom_call.1} parent=47 // pred_region
          %385 = dma.done %s378, 1024
        $region52: #{tpu_custom_call.1} parent=47 // pred_fallthru
          _
        // Predicated region
        $region53: #{tpu_custom_call.1} parent=47 // pred_check
          %p386 = pneg %p75
        $region54: #{tpu_custom_call.1} parent=47 // pred_check_branch
          %388 = sbr.rel (%p386) target = $region56
        $region55: #{tpu_custom_call.1} parent=47 // pred_region
          %389 = dma.done [#allocation6], 512
        $region56: #{tpu_custom_call.1} parent=47 // pred_fallthru
          _
        // Predicated region
        $region57: #{tpu_custom_call.1} parent=47 // pred_check
          %p390 = pneg %p96
        $region58: #{tpu_custom_call.1} parent=47 // pred_check_branch
          %392 = sbr.rel (%p390) target = $region60
        $region59: #{tpu_custom_call.1} parent=47 // pred_region
          %393 = dma.done [#allocation6], 512
        $region60: #{tpu_custom_call.1} parent=47 // pred_fallthru
          _
        // Predicated region
        $region61: #{tpu_custom_call.1} parent=47 // pred_check
          %p394 = pneg %p117
        $region62: #{tpu_custom_call.1} parent=47 // pred_check_branch
          %396 = sbr.rel (%p394) target = $region64
        $region63: #{tpu_custom_call.1} parent=47 // pred_region
          %397 = dma.done [#allocation9], 16
        $region64: #{tpu_custom_call.1} parent=47 // pred_fallthru
          _
        // Predicated region
        $region65: #{tpu_custom_call.1} parent=47 // pred_check
          %p398 = pneg %p138
        $region66: #{tpu_custom_call.1} parent=47 // pred_check_branch
          %400 = sbr.rel (%p398) target = $region68
        $region67: #{tpu_custom_call.1} parent=47 // pred_region
          %401 = dma.done [#allocation9], 16
        $region68: #{tpu_custom_call.1} parent=47 // pred_fallthru
          _
        // Predicated region
        $region69: #{tpu_custom_call.1} parent=47 // pred_check
          %p402 = pneg %p159
        $region70: #{tpu_custom_call.1} parent=47 // pred_check_branch
          %404 = sbr.rel (%p402) target = $region72
        $region71: #{tpu_custom_call.1} parent=47 // pred_region
          %405 = dma.done [#allocation12], 256
        $region72: #{tpu_custom_call.1} parent=47 // pred_fallthru
          _
        // Predicated region
        $region73: #{tpu_custom_call.1} parent=47 // pred_check
          %p406 = pneg %p180
        $region74: #{tpu_custom_call.1} parent=47 // pred_check_branch
          %408 = sbr.rel (%p406) target = $region76
        $region75: #{tpu_custom_call.1} parent=47 // pred_region
          %409 = dma.done [#allocation12], 16
        $region76: #{tpu_custom_call.1} parent=47 // pred_fallthru
          _
        %s410 = sand.u32 %s41, 1
        %s411 = scalar_lea.sflag [#allocation3], %s410
        %s412 = sand.u32 %s41, 1
        %s413 = smul.addr %s412, 64
        %s414 = scalar_lea.vmem [#allocation2], %s413
        %p415 = pneg %p54
        %p416 = pneg %p51
        %p417 = pneg %p75
        %p418 = pneg %p72
        %p419 = pneg %p96
        %p420 = pneg %p93
        %p421 = pneg %p117
        %p422 = pneg %p114
        %p423 = pneg %p138
        %p424 = pneg %p135
        %p425 = pneg %p159
        %p426 = pneg %p156
        %p427 = pneg %p180
        %p428 = pneg %p177
        %p429 = pneg %p206
        %p430 = pneg %p203
        %s431 = sand.u32 %s193, 1
        %s432 = scalar_lea.sflag [#allocation4], %s431
        %s433 = sand.u32 %s193, 1
        %s434 = smul.addr %s433, 32
        %s435 = scalar_lea.vmem [#allocation14], %s434
        %p436 = pneg %p232
        %p437 = pneg %p229
        %s438 = sand.u32 %s33, 1
        %s439 = scalar_lea.sflag [#allocation16], %s438
        %s440 = sand.u32 %s219, 1
        %s441 = smul.addr %s440, 32
        %s442 = scalar_lea.vmem [#allocation15], %s441
        %p443 = pneg %p258
        %p444 = pneg %p255
        %s445 = sand.u32 %s33, 1
        %s446 = scalar_lea.sflag [#allocation16], %s445
        %s447 = sand.u32 %s245, 1
        %s448 = smul.addr %s447, 32
        %s449 = scalar_lea.vmem [#allocation17], %s448
        %v451 = vld [vmem:[%s381] sm:$0xff]
        %v452 = vld [vmem:[%s381 + $0x8] sm:$0xff]
        %v453 = vld [vmem:[%s381 + $0x10] sm:$0xff]
        %v454 = vld [vmem:[%s381 + $0x18] sm:$0xff]
        %v455 = vld [vmem:[%s381 + $0x20] sm:$0xff]
        %v456 = vld [vmem:[%s381 + $0x28] sm:$0xff]
        %v457 = vld [vmem:[%s381 + $0x30] sm:$0xff]
        %v458 = vld [vmem:[%s381 + $0x38] sm:$0xff]
        %vm459 = vcmask 261120
        %v460 = vsel %vm459, %v451, 0.0
        %v461 = vsel %vm459, %v452, 0.0
        %v462 = vadd.f32 %v460, %v461
        %v463 = vsel %vm459, %v453, 0.0
        %v464 = vadd.f32 %v462, %v463
        %v465 = vsel %vm459, %v454, 0.0
        %v466 = vadd.f32 %v464, %v465
        %v467 = vsel %vm459, %v455, 0.0
        %v468 = vadd.f32 %v466, %v467
        %v469 = vsel %vm459, %v456, 0.0
        %v470 = vadd.f32 %v468, %v469
        %v471 = vsel %vm459, %v457, 0.0
        %v472 = vadd.f32 %v470, %v471
        %v473 = vsel %vm459, %v458, 0.0
        %v474 = vadd.f32 %v472, %v473
        %v475 = vrot.slane %v474, 4
        %v476 = vadd.f32 %v474, %v475
        %v477 = vrot.slane %v476, 2
        %v478 = vadd.f32 %v476, %v477
        %v479 = vrot.slane %v478, 1
        %v480 = vadd.f32 %v478, %v479
        %v481 = vmul.f32 %v451, %v451
        %v482 = vmul.f32 %v452, %v452
        %v483 = vmul.f32 %v453, %v453
        %v484 = vmul.f32 %v454, %v454
        %v485 = vmul.f32 %v455, %v455
        %v486 = vmul.f32 %v456, %v456
        %v487 = vmul.f32 %v457, %v457
        %v488 = vmul.f32 %v458, %v458
        %v489 = vsel %vm459, %v481, 0.0
        %v490 = vsel %vm459, %v482, 0.0
        %v491 = vadd.f32 %v489, %v490
        %v492 = vsel %vm459, %v483, 0.0
        %v493 = vadd.f32 %v491, %v492
        %v494 = vsel %vm459, %v484, 0.0
        %v495 = vadd.f32 %v493, %v494
        %v496 = vsel %vm459, %v485, 0.0
        %v497 = vadd.f32 %v495, %v496
        %v498 = vsel %vm459, %v486, 0.0
        %v499 = vadd.f32 %v497, %v498
        %v500 = vsel %vm459, %v487, 0.0
        %v501 = vadd.f32 %v499, %v500
        %v502 = vsel %vm459, %v488, 0.0
        %v503 = vadd.f32 %v501, %v502
        %v504 = vrot.slane %v503, 4
        %v505 = vadd.f32 %v503, %v504
        %v506 = vrot.slane %v505, 2
        %v507 = vadd.f32 %v505, %v506
        %v508 = vrot.slane %v507, 1
        %v509 = vadd.f32 %v507, %v508
        %vm510 = vcmask 1040384
        %v511 = vsel %vm510, %v480, %v509
        %v512 = vld [vmem:[#allocation5] sm:$0xff]
        %v513 = vld [vmem:[#allocation5 + $0x8] sm:$0xff]
        %v514 = vld [vmem:[#allocation5 + $0x10] sm:$0xff]
        %v515 = vld [vmem:[#allocation5 + $0x18] sm:$0xff]
        %v517 = vsel %vm459, %v511, 0
        %519 = vmatprep.subr.mxu0 0.0
        %520 = vmatpush1.msra.mxu0 %v512
        %521 = vmatprep.subr.mxu0 0.0
        %522 = vmatpush1.msra.mxu0 %v513
        %523 = vmatprep.subr.mxu0 0.0
        %524 = vmatpush1.msra.mxu0 %v514
        %525 = vmatprep.subr.mxu0 0.0
        %526 = vmatpush1.msra.mxu0 %v515
        %527 = vmatprep.subr.mxu0 0.0
        %528 = vmatpush1.msra.mxu0 0.0
        %529 = vmatprep.subr.mxu0 0.0
        %530 = vmatpush1.msra.mxu0 0.0
        %531 = vmatprep.subr.mxu0 0.0
        %532 = vmatpush1.msra.mxu0 0.0
        %533 = vmatprep.subr.mxu0 0.0
        %534 = vmatpush1.msra.mxu0 0.0
        %535 = vmatprep.subr.mxu0 0.0
        %536 = vmatpush1.msra.mxu0 0.0
        %537 = vmatprep.subr.mxu0 0.0
        %538 = vmatpush1.msra.mxu0 0.0
        %539 = vmatprep.subr.mxu0 0.0
        %540 = vmatpush1.msra.mxu0 0.0
        %541 = vmatprep.subr.mxu0 0.0
        %542 = vmatpush1.msra.mxu0 0.0
        %543 = vmatprep.subr.mxu0 0.0
        %544 = vmatpush1.msra.mxu0 0.0
        %545 = vmatprep.subr.mxu0 0.0
        %546 = vmatpush1.msra.mxu0 0.0
        %547 = vmatprep.subr.mxu0 0.0
        %548 = vmatpush1.msra.mxu0 0.0
        %549 = vmatprep.subr.mxu0 0.0
        %550 = vmatpush1.msra.mxu0 0.0
        %551 = vmatprep.subr.mxu0 0.0
        %552 = vmatpush1.msra.mxu0 0.0
        %553 = vmatprep.subr.mxu0 0.0
        %554 = vmatpush1.msra.mxu0 0.0
        %555 = vmatprep.subr.mxu0 0.0
        %556 = vmatpush1.msra.mxu0 0.0
        %557 = vmatprep.subr.mxu0 0.0
        %558 = vmatpush1.msra.mxu0 0.0
        %559 = vmatprep.subr.mxu0 0.0
        %560 = vmatpush1.msra.mxu0 0.0
        %561 = vmatprep.subr.mxu0 0.0
        %562 = vmatpush1.msra.mxu0 0.0
        %563 = vmatprep.subr.mxu0 0.0
        %564 = vmatpush1.msra.mxu0 0.0
        %565 = vmatprep.subr.mxu0 0.0
        %566 = vmatpush1.msra.mxu0 0.0
        %567 = vmatprep.subr.mxu0 0.0
        %568 = vmatpush1.msra.mxu0 0.0
        %569 = vmatprep.subr.mxu0 0.0
        %570 = vmatpush1.msra.mxu0 0.0
        %571 = vmatprep.subr.mxu0 0.0
        %572 = vmatpush1.msra.mxu0 0.0
        %573 = vmatprep.subr.mxu0 0.0
        %574 = vmatpush1.msra.mxu0 0.0
        %575 = vmatprep.subr.mxu0 0.0
        %576 = vmatpush1.msra.mxu0 0.0
        %577 = vmatprep.subr.mxu0 0.0
        %578 = vmatpush1.msra.mxu0 0.0
        %579 = vmatprep.subr.mxu0 0.0
        %580 = vmatpush1.msra.mxu0 0.0
        %581 = vmatprep.subr.mxu0 0.0
        %582 = vmatpush1.msra.mxu0 0.0
        %583 = vmatprep.mubr.f32.mxu0 0.0
        %584 = vmatmul.mubr.f32.gmra.mrb[0].mxu0 %v517
        %v585 = vpop.f32.mrb[0].mxu0
        %v586 = vadd.f32 0.0, %v585
        %v587 = vpop.f32.mrb[0].mxu0
        %588 = vdwg.mxu0
        %v589 = vmul.f32 %v586, 0.015625
        %v590 = vld [vmem:[#allocation7] sm:$0xff]
        %v591 = vld [vmem:[#allocation7 + $0x8] sm:$0xff]
        %v592 = vld [vmem:[#allocation7 + $0x10] sm:$0xff]
        %v593 = vld [vmem:[#allocation7 + $0x18] sm:$0xff]
        %v595 = vsel %vm459, %v589, 0
        %597 = vmatprep.subr.mxu0 0.0
        %598 = vmatpush1.msra.mxu0 %v590
        %599 = vmatprep.subr.mxu0 0.0
        %600 = vmatpush1.msra.mxu0 %v591
        %601 = vmatprep.subr.mxu0 0.0
        %602 = vmatpush1.msra.mxu0 %v592
        %603 = vmatprep.subr.mxu0 0.0
        %604 = vmatpush1.msra.mxu0 %v593
        %605 = vmatprep.subr.mxu0 0.0
        %606 = vmatpush1.msra.mxu0 0.0
        %607 = vmatprep.subr.mxu0 0.0
        %608 = vmatpush1.msra.mxu0 0.0
        %609 = vmatprep.subr.mxu0 0.0
        %610 = vmatpush1.msra.mxu0 0.0
        %611 = vmatprep.subr.mxu0 0.0
        %612 = vmatpush1.msra.mxu0 0.0
        %613 = vmatprep.subr.mxu0 0.0
        %614 = vmatpush1.msra.mxu0 0.0
        %615 = vmatprep.subr.mxu0 0.0
        %616 = vmatpush1.msra.mxu0 0.0
        %617 = vmatprep.subr.mxu0 0.0
        %618 = vmatpush1.msra.mxu0 0.0
        %619 = vmatprep.subr.mxu0 0.0
        %620 = vmatpush1.msra.mxu0 0.0
        %621 = vmatprep.subr.mxu0 0.0
        %622 = vmatpush1.msra.mxu0 0.0
        %623 = vmatprep.subr.mxu0 0.0
        %624 = vmatpush1.msra.mxu0 0.0
        %625 = vmatprep.subr.mxu0 0.0
        %626 = vmatpush1.msra.mxu0 0.0
        %627 = vmatprep.subr.mxu0 0.0
        %628 = vmatpush1.msra.mxu0 0.0
        %629 = vmatprep.subr.mxu0 0.0
        %630 = vmatpush1.msra.mxu0 0.0
        %631 = vmatprep.subr.mxu0 0.0
        %632 = vmatpush1.msra.mxu0 0.0
        %633 = vmatprep.subr.mxu0 0.0
        %634 = vmatpush1.msra.mxu0 0.0
        %635 = vmatprep.subr.mxu0 0.0
        %636 = vmatpush1.msra.mxu0 0.0
        %637 = vmatprep.subr.mxu0 0.0
        %638 = vmatpush1.msra.mxu0 0.0
        %639 = vmatprep.subr.mxu0 0.0
        %640 = vmatpush1.msra.mxu0 0.0
        %641 = vmatprep.subr.mxu0 0.0
        %642 = vmatpush1.msra.mxu0 0.0
        %643 = vmatprep.subr.mxu0 0.0
        %644 = vmatpush1.msra.mxu0 0.0
        %645 = vmatprep.subr.mxu0 0.0
        %646 = vmatpush1.msra.mxu0 0.0
        %647 = vmatprep.subr.mxu0 0.0
        %648 = vmatpush1.msra.mxu0 0.0
        %649 = vmatprep.subr.mxu0 0.0
        %650 = vmatpush1.msra.mxu0 0.0
        %651 = vmatprep.subr.mxu0 0.0
        %652 = vmatpush1.msra.mxu0 0.0
        %653 = vmatprep.subr.mxu0 0.0
        %654 = vmatpush1.msra.mxu0 0.0
        %655 = vmatprep.subr.mxu0 0.0
        %656 = vmatpush1.msra.mxu0 0.0
        %657 = vmatprep.subr.mxu0 0.0
        %658 = vmatpush1.msra.mxu0 0.0
        %659 = vmatprep.subr.mxu0 0.0
        %660 = vmatpush1.msra.mxu0 0.0
        %661 = vmatprep.mubr.f32.mxu0 0.0
        %662 = vmatmul.mubr.f32.gmra.mrb[0].mxu0 %v595
        %v663 = vpop.f32.mrb[0].mxu0
        %v664 = vadd.f32 0.0, %v663
        %v665 = vpop.f32.mrb[0].mxu0
        %666 = vdwg.mxu0
        %v667 = vmul.f32 %v664, %v664
        %v669 = vrot.slane %v667, 7
        %v671 = vsub.f32 %v664, %v669
        %v672 = vmax.f32 %v671, 0.0
        %v673 = vadd.f32 %v672, 1e-05
        %v674 = vrsqrt.pop %v673
        %v675 = vlaneseq
        %v676 = vshrl.u32 %v675, 7
        %v677 = vsub.s32 0, %v676
        %v678 = vrot.slane %v664, %v677
        %v679 = vsub.f32 %v451, %v678
        %v680 = vsub.f32 %v452, %v678
        %v681 = vsub.f32 %v453, %v678
        %v682 = vsub.f32 %v454, %v678
        %v683 = vsub.f32 %v455, %v678
        %v684 = vsub.f32 %v456, %v678
        %v685 = vsub.f32 %v457, %v678
        %v686 = vsub.f32 %v458, %v678
        %v687 = vld [vmem:[#allocation8] sm:$0x1]
        %v689 = vlaneseq
        %v690 = vshrl.u32 %v689, 7
        %v691 = vsub.s32 0, %v690
        %v692 = vrot.slane %v687, %v691
        %v694 = vmul.f32 %v674, %v692
        %v695 = vlaneseq
        %v696 = vshrl.u32 %v695, 7
        %v697 = vsub.s32 1, %v696
        %v698 = vrot.slane %v694, %v697
        %v699 = vmul.f32 %v679, %v698
        %v700 = vmul.f32 %v680, %v698
        %v701 = vmul.f32 %v681, %v698
        %v702 = vmul.f32 %v682, %v698
        %v703 = vmul.f32 %v683, %v698
        %v704 = vmul.f32 %v684, %v698
        %v705 = vmul.f32 %v685, %v698
        %v706 = vmul.f32 %v686, %v698
        %v707 = vld [vmem:[#allocation10] sm:$0x1]
        %v709 = vlaneseq
        %v710 = vshrl.u32 %v709, 7
        %v711 = vsub.s32 0, %v710
        %v712 = vrot.slane %v707, %v711
        %v714 = vadd.f32 %v699, %v712
        %v715 = vadd.f32 %v700, %v712
        %v716 = vadd.f32 %v701, %v712
        %v717 = vadd.f32 %v702, %v712
        %v718 = vadd.f32 %v703, %v712
        %v719 = vadd.f32 %v704, %v712
        %v720 = vadd.f32 %v705, %v712
        %v721 = vadd.f32 %v706, %v712
        %v722 = vpack.c.bf16 %v715, %v714
        %v723 = vpack.c.bf16 %v717, %v716
        %v724 = vpack.c.bf16 %v719, %v718
        %v725 = vpack.c.bf16 %v721, %v720
        %v726 = vld [vmem:[#allocation11] sm:$0xf]
        %v727 = vld [vmem:[#allocation11 + $0x4] sm:$0xf]
        %v728 = vld [vmem:[#allocation11 + $0x8] sm:$0xf]
        %v729 = vld [vmem:[#allocation11 + $0xc] sm:$0xf]
        %v730 = vld [vmem:[#allocation13] sm:$0x1]
        %v732 = vlaneseq
        %v733 = vshrl.u32 %v732, 7
        %v734 = vsub.s32 0, %v733
        %v735 = vrot.slane %v730, %v734
        %v741 = vunpack.c.l.b16 %v726
        %v742 = vunpack.c.l.b16 %v727
        %v743 = vunpack.c.l.b16 %v728
        %v744 = vunpack.c.l.b16 %v729
        %v745 = vpack.c.b16 %v742, %v741
        %v746 = vpack.c.b16 %v744, %v743
        %v750 = vsel %vm459, %v722, 0
        %v753 = vsel %vm459, %v723, 0
        %v756 = vsel %vm459, %v724, 0
        %v759 = vsel %vm459, %v725, 0
        %761 = vmatprep.subr.bf16.mxu0 0
        %762 = vmatpush1.bf16.msra.mxu0 %v745
        %763 = vmatprep.subr.bf16.mxu0 0
        %764 = vmatpush1.bf16.msra.mxu0 %v746
        %765 = vmatprep.subr.bf16.mxu0 0
        %766 = vmatpush1.bf16.msra.mxu0 0
        %767 = vmatprep.subr.bf16.mxu0 0
        %768 = vmatpush1.bf16.msra.mxu0 0
        %769 = vmatprep.subr.bf16.mxu0 0
        %770 = vmatpush1.bf16.msra.mxu0 0
        %771 = vmatprep.subr.bf16.mxu0 0
        %772 = vmatpush1.bf16.msra.mxu0 0
        %773 = vmatprep.subr.bf16.mxu0 0
        %774 = vmatpush1.bf16.msra.mxu0 0
        %775 = vmatprep.subr.bf16.mxu0 0
        %776 = vmatpush1.bf16.msra.mxu0 0
        %777 = vmatprep.subr.bf16.mxu0 0
        %778 = vmatpush1.bf16.msra.mxu0 0
        %779 = vmatprep.subr.bf16.mxu0 0
        %780 = vmatpush1.bf16.msra.mxu0 0
        %781 = vmatprep.subr.bf16.mxu0 0
        %782 = vmatpush1.bf16.msra.mxu0 0
        %783 = vmatprep.subr.bf16.mxu0 0
        %784 = vmatpush1.bf16.msra.mxu0 0
        %785 = vmatprep.subr.bf16.mxu0 0
        %786 = vmatpush1.bf16.msra.mxu0 0
        %787 = vmatprep.subr.bf16.mxu0 0
        %788 = vmatpush1.bf16.msra.mxu0 0
        %789 = vmatprep.subr.bf16.mxu0 0
        %790 = vmatpush1.bf16.msra.mxu0 0
        %791 = vmatprep.subr.bf16.mxu0 0
        %792 = vmatpush1.bf16.msra.mxu0 0
        %793 = vmatprep.mubr.bf16.mxu0 0
        %794 = vmatmul.mubr.bf16.gmra.mrb[0].mxu0 %v750
        %v795 = vpop.f32.mrb[0].mxu0
        %v796 = vadd.f32 %v735, %v795
        %v797 = vpop.f32.mrb[0].mxu0
        %v798 = vpop.f32.mrb[0].mxu0
        %v799 = vadd.f32 %v735, %v798
        %v800 = vpop.f32.mrb[0].mxu0
        %801 = vmatprep.mubr.bf16.mxu0 0
        %802 = vmatmul.mubr.bf16.gmra.mrb[0].mxu0 %v753
        %v803 = vpop.f32.mrb[0].mxu0
        %v804 = vadd.f32 %v735, %v803
        %v805 = vpop.f32.mrb[0].mxu0
        %v806 = vpop.f32.mrb[0].mxu0
        %v807 = vadd.f32 %v735, %v806
        %v808 = vpop.f32.mrb[0].mxu0
        %809 = vmatprep.mubr.bf16.mxu0 0
        %810 = vmatmul.mubr.bf16.gmra.mrb[0].mxu0 %v756
        %v811 = vpop.f32.mrb[0].mxu0
        %v812 = vadd.f32 %v735, %v811
        %v813 = vpop.f32.mrb[0].mxu0
        %v814 = vpop.f32.mrb[0].mxu0
        %v815 = vadd.f32 %v735, %v814
        %v816 = vpop.f32.mrb[0].mxu0
        %817 = vmatprep.mubr.bf16.mxu0 0
        %818 = vmatmul.mubr.bf16.gmra.mrb[0].mxu0 %v759
        %v819 = vpop.f32.mrb[0].mxu0
        %v820 = vadd.f32 %v735, %v819
        %v821 = vpop.f32.mrb[0].mxu0
        %v822 = vpop.f32.mrb[0].mxu0
        %v823 = vadd.f32 %v735, %v822
        %v824 = vpop.f32.mrb[0].mxu0
        %825 = vdwg.mxu0
        %v826 = vpack.c.bf16 %v799, %v796
        %v827 = vpack.c.bf16 %v807, %v804
        %v828 = vpack.c.bf16 %v815, %v812
        %v829 = vpack.c.bf16 %v823, %v820
        %v834 = vunpack.c.l.b16 %v826
        %v835 = vunpack.c.h.b16 %v826
        %v836 = vunpack.c.l.b16 %v827
        %v837 = vunpack.c.h.b16 %v827
        %v838 = vunpack.c.l.b16 %v828
        %v839 = vunpack.c.h.b16 %v828
        %v840 = vunpack.c.l.b16 %v829
        %v841 = vunpack.c.h.b16 %v829
        %v842 = vpack.c.b16 %v834, %v834
        %v843 = vpack.c.b16 %v835, %v835
        %v844 = vpack.c.b16 %v836, %v836
        %v845 = vpack.c.b16 %v837, %v837
        %v846 = vpack.c.b16 %v838, %v838
        %v847 = vpack.c.b16 %v839, %v839
        %v848 = vpack.c.b16 %v840, %v840
        %v849 = vpack.c.b16 %v841, %v841
        %vm858 = vcmask 257024
        %859 = vst.msk [vmem:[%s435] sm:$0xf] %vm858, %v842
        %860 = vst.msk [vmem:[%s435 + $0x4] sm:$0xf] %vm858, %v843
        %861 = vst.msk [vmem:[%s435 + $0x8] sm:$0xf] %vm858, %v844
        %862 = vst.msk [vmem:[%s435 + $0xc] sm:$0xf] %vm858, %v845
        %863 = vst.msk [vmem:[%s435 + $0x10] sm:$0xf] %vm858, %v846
        %864 = vst.msk [vmem:[%s435 + $0x14] sm:$0xf] %vm858, %v847
        %865 = vst.msk [vmem:[%s435 + $0x18] sm:$0xf] %vm858, %v848
        %866 = vst.msk [vmem:[%s435 + $0x1c] sm:$0xf] %vm858, %v849
        %867 = vrot.lane.b32.xlu0 %v842, 96
        %v868 = vpop.permute.xlu0 %867
        %869 = vrot.lane.b32.xlu0 %v843, 96
        %v870 = vpop.permute.xlu0 %869
        %871 = vrot.lane.b32.xlu0 %v844, 96
        %v872 = vpop.permute.xlu0 %871
        %873 = vrot.lane.b32.xlu0 %v845, 96
        %v874 = vpop.permute.xlu0 %873
        %875 = vrot.lane.b32.xlu0 %v846, 96
        %v876 = vpop.permute.xlu0 %875
        %877 = vrot.lane.b32.xlu0 %v847, 96
        %v878 = vpop.permute.xlu0 %877
        %879 = vrot.lane.b32.xlu0 %v848, 96
        %v880 = vpop.permute.xlu0 %879
        %881 = vrot.lane.b32.xlu0 %v849, 96
        %v882 = vpop.permute.xlu0 %881
        %891 = vst.msk [vmem:[%s442] sm:$0xf] %vm858, %v868
        %892 = vst.msk [vmem:[%s442 + $0x4] sm:$0xf] %vm858, %v870
        %893 = vst.msk [vmem:[%s442 + $0x8] sm:$0xf] %vm858, %v872
        %894 = vst.msk [vmem:[%s442 + $0xc] sm:$0xf] %vm858, %v874
        %895 = vst.msk [vmem:[%s442 + $0x10] sm:$0xf] %vm858, %v876
        %896 = vst.msk [vmem:[%s442 + $0x14] sm:$0xf] %vm858, %v878
        %897 = vst.msk [vmem:[%s442 + $0x18] sm:$0xf] %vm858, %v880
        %898 = vst.msk [vmem:[%s442 + $0x1c] sm:$0xf] %vm858, %v882
        %899 = vrot.lane.b32.xlu0 %v842, 64
        %v900 = vpop.permute.xlu0 %899
        %901 = vrot.lane.b32.xlu0 %v843, 64
        %v902 = vpop.permute.xlu0 %901
        %903 = vrot.lane.b32.xlu0 %v844, 64
        %v904 = vpop.permute.xlu0 %903
        %905 = vrot.lane.b32.xlu0 %v845, 64
        %v906 = vpop.permute.xlu0 %905
        %907 = vrot.lane.b32.xlu0 %v846, 64
        %v908 = vpop.permute.xlu0 %907
        %909 = vrot.lane.b32.xlu0 %v847, 64
        %v910 = vpop.permute.xlu0 %909
        %911 = vrot.lane.b32.xlu0 %v848, 64
        %v912 = vpop.permute.xlu0 %911
        %913 = vrot.lane.b32.xlu0 %v849, 64
        %v914 = vpop.permute.xlu0 %913
        %923 = vst.msk [vmem:[%s449] sm:$0xf] %vm858, %v900
        %924 = vst.msk [vmem:[%s449 + $0x4] sm:$0xf] %vm858, %v902
        %925 = vst.msk [vmem:[%s449 + $0x8] sm:$0xf] %vm858, %v904
        %926 = vst.msk [vmem:[%s449 + $0xc] sm:$0xf] %vm858, %v906
        %927 = vst.msk [vmem:[%s449 + $0x10] sm:$0xf] %vm858, %v908
        %928 = vst.msk [vmem:[%s449 + $0x14] sm:$0xf] %vm858, %v910
        %929 = vst.msk [vmem:[%s449 + $0x18] sm:$0xf] %vm858, %v912
        %930 = vst.msk [vmem:[%s449 + $0x1c] sm:$0xf] %vm858, %v914
        %s931 = sand.u32 %s193, 1
        %s932 = scalar_lea.sflag [#allocation4], %s931
        %s933 = sand.u32 %s193, 1
        %s934 = smul.addr %s933, 32
        %s935 = scalar_lea.vmem [#allocation14], %s934
        %s936 = sand.u32 %s33, 1
        %s937 = scalar_lea.sflag [#allocation16], %s936
        %s938 = sand.u32 %s219, 1
        %s939 = smul.addr %s938, 32
        %s940 = scalar_lea.vmem [#allocation15], %s939
        %s941 = sand.u32 %s33, 1
        %s942 = scalar_lea.sflag [#allocation16], %s941
        %s943 = sand.u32 %s245, 1
        %s944 = smul.addr %s943, 32
        %s945 = scalar_lea.vmem [#allocation17], %s944
        // Predicated region
        $region77: #{tpu_custom_call.1} parent=47 // pred_check
          %p946 = pneg %p203
        $region78: #{tpu_custom_call.1} parent=47 // pred_check_branch
          %948 = sbr.rel (%p946) target = $region80
        $region79: #{tpu_custom_call.1} parent=47 // pred_region
          %s950 = ssub.s32 512, 512
          %951 = vsyncadd %s932, %s950
          %s952 = smul.addr %s33, 8
          %s953 = smul.addr %s952, 64
          %s954 = scalar_lea.hbm %s7, %s953
          %s955 = sshll.u32 %s935, 4
          %s956 = int_to_ptr.vmem [resolvable:$true] %s955
          %961 = dma.vmem_to_hbm [thread:$0]  %s956, 512, %s954, %s932, 64, 64, 4
        $region80: #{tpu_custom_call.1} parent=47 // pred_fallthru
          _
        // Predicated region
        $region81: #{tpu_custom_call.1} parent=47 // pred_check
          %p962 = pneg %p229
        $region82: #{tpu_custom_call.1} parent=47 // pred_check_branch
          %964 = sbr.rel (%p962) target = $region84
        $region83: #{tpu_custom_call.1} parent=47 // pred_region
          %s966 = ssub.s32 512, 512
          %967 = vsyncadd %s937, %s966
          %s968 = smul.addr %s33, 8
          %s969 = smul.addr %s968, 64
          %s970 = scalar_lea.hbm %s8, %s969
          %s971 = sshll.u32 %s940, 4
          %s972 = int_to_ptr.vmem [resolvable:$true] %s971
          %977 = dma.vmem_to_hbm [thread:$0]  %s972, 512, %s970, %s937, 64, 64, 4
        $region84: #{tpu_custom_call.1} parent=47 // pred_fallthru
          _
        // Predicated region
        $region85: #{tpu_custom_call.1} parent=47 // pred_check
          %p978 = pneg %p255
        $region86: #{tpu_custom_call.1} parent=47 // pred_check_branch
          %980 = sbr.rel (%p978) target = $region88
        $region87: #{tpu_custom_call.1} parent=47 // pred_region
          %s982 = ssub.s32 512, 512
          %983 = vsyncadd %s942, %s982
          %s984 = smul.addr %s33, 8
          %s985 = smul.addr %s984, 64
          %s986 = scalar_lea.hbm %s9, %s985
          %s987 = sshll.u32 %s945, 4
          %s988 = int_to_ptr.vmem [resolvable:$true] %s987
          %993 = dma.vmem_to_hbm [thread:$0]  %s988, 512, %s986, %s942, 64, 64, 4
        $region88: #{tpu_custom_call.1} parent=47 // pred_fallthru
          _
      $region48: #{tpu_custom_call.1} parent=5 // pred_fallthru
        _
      %p994 = scmp.le.s32.totalorder 2, %s28
      // Predicated region
      $region89: #{tpu_custom_call.1} parent=5 // pred_check
        %p995 = pneg %p994
      $region90: #{tpu_custom_call.1} parent=5 // pred_check_branch
        %997 = sbr.rel (%p995) target = $region92
      $region91: #{tpu_custom_call.1} parent=5 // pred_region
        %s998 = ssub.s32 %s28, 2
        // Predicated region
        $region93: #{tpu_custom_call.1} parent=91 // pred_check
          %p999 = pneg %p209
        $region94: #{tpu_custom_call.1} parent=91 // pred_check_branch
          %1001 = sbr.rel (%p999) target = $region96
        $region95: #{tpu_custom_call.1} parent=91 // pred_region
          %s1002 = sand.u32 %s194, 1
          %s1003 = scalar_lea.sflag [#allocation4], %s1002
          %s1004 = sand.u32 %s194, 1
          %s1005 = smul.addr %s1004, 32
          %s1006 = scalar_lea.vmem [#allocation14], %s1005
          %1007 = dma.done %s1003, 512
        $region96: #{tpu_custom_call.1} parent=91 // pred_fallthru
          _
        // Predicated region
        $region97: #{tpu_custom_call.1} parent=91 // pred_check
          %p1008 = pneg %p235
        $region98: #{tpu_custom_call.1} parent=91 // pred_check_branch
          %1010 = sbr.rel (%p1008) target = $region100
        $region99: #{tpu_custom_call.1} parent=91 // pred_region
          %s1011 = sand.u32 %s34, 1
          %s1012 = scalar_lea.sflag [#allocation16], %s1011
          %s1013 = sand.u32 %s220, 1
          %s1014 = smul.addr %s1013, 32
          %s1015 = scalar_lea.vmem [#allocation15], %s1014
          %1016 = dma.done %s1012, 512
        $region100: #{tpu_custom_call.1} parent=91 // pred_fallthru
          _
        // Predicated region
        $region101: #{tpu_custom_call.1} parent=91 // pred_check
          %p1017 = pneg %p261
        $region102: #{tpu_custom_call.1} parent=91 // pred_check_branch
          %1019 = sbr.rel (%p1017) target = $region104
        $region103: #{tpu_custom_call.1} parent=91 // pred_region
          %s1020 = sand.u32 %s34, 1
          %s1021 = scalar_lea.sflag [#allocation16], %s1020
          %s1022 = sand.u32 %s246, 1
          %s1023 = smul.addr %s1022, 32
          %s1024 = scalar_lea.vmem [#allocation17], %s1023
          %1025 = dma.done %s1021, 512
        $region104: #{tpu_custom_call.1} parent=91 // pred_fallthru
          _
      $region92: #{tpu_custom_call.1} parent=5 // pred_fallthru
        _
    $region6: #{tpu_custom_call.1} parent=1 // loop_footer
      %s32 = sadd.s32 1, %s28
    $region7: #{tpu_custom_call.1} parent=1 // loop_footer_branch
      %27 = sbr.rel target = $region3
    $region8: #{tpu_custom_call.1} parent=1 // loop_exit
      _
    %1026 = vsyncpa [#allocation3], 1
    %s1027 = scalar_lea.sflag [#allocation3], 1
    %1028 = vsyncpa %s1027, 1
    %1029 = vsyncpa [#allocation6], 1
    %1030 = vsyncpa [#allocation9], 1
    %1031 = vsyncpa [#allocation12], 1
    %1032 = vsyncpa [#allocation4], 1
    %s1033 = scalar_lea.sflag [#allocation4], 1
    %1034 = vsyncpa %s1033, 1
    %1035 = vsyncpa [#allocation16], 1
    %s1036 = scalar_lea.sflag [#allocation16], 1
    %1037 = vsyncpa %s1036, 1

</llo_original>
